<compile_context>
chip_gen: v7x
topology: tpu7x:2x2x1
jax: 0.10.0
libtpu: 0.0.40
codegen_flags: <defaults>
</compile_context>

<pallas_src>
import jax
import jax.numpy as jnp
from jax.experimental import pallas as pl
from jax.experimental.pallas import tpu as pltpu


def clip_mlp_kernel(x_ref, w1_ref, b1_ref, w2_ref, b2_ref, o_ref, acc_ref):
    # x_ref : (TM, H)   token tile (native dtype)
    # w1_ref: (H, TI)   fc1 weight slice, (in, out) layout
    # b1_ref: (1, TI)   fc1 bias slice
    # w2_ref: (TI, H)   fc2 weight slice, (in, out) layout
    # b2_ref: (1, H)    fc2 bias (resident)
    # o_ref : (TM, H)   output tile
    # acc_ref: (TM, H)  f32 accumulator scratch, resident across the k axis
    k = pl.program_id(1)

    @pl.when(k == 0)
    def _init():
        acc_ref[...] = jnp.zeros_like(acc_ref)

    # fc1 slice on the MXU at native dtype with f32 accumulation.
    h = jnp.dot(x_ref[...], w1_ref[...], preferred_element_type=jnp.float32)
    h = h + b1_ref[...].astype(jnp.float32)

    # QuickGELU in f32; sigmoid lowers to the EUP slot (hidden under the MXU).
    h = h * jax.nn.sigmoid(1.702 * h)

    # fc2 partial product over this I-slice, accumulated in f32.
    acc_ref[...] += jnp.dot(h.astype(w2_ref.dtype), w2_ref[...],
                            preferred_element_type=jnp.float32)

    @pl.when(k == pl.num_programs(1) - 1)
    def _finalize():
        y = acc_ref[...] + b2_ref[...].astype(jnp.float32)
        o_ref[...] = y.astype(o_ref.dtype)


def _largest_tile(total, base=128, limit=1024):
    """Largest divisor of `total` that is a multiple of `base` and <= limit."""
    best = None
    for d in range(base, min(limit, total) + 1, base):
        if total % d == 0:
            best = d
    return best if best is not None else total


def clip_mlp(hidden_states, w1_t, b1, w2_t, b2, *, tm=512):
    """Fused CLIP MLP forward.

    hidden_states: (B, S, H)
    w1_t: (H, I)  fc1 weight pre-transposed to (in, out)
    b1:   (I,)
    w2_t: (I, H)  fc2 weight pre-transposed to (in, out)
    b2:   (H,)
    """
    B, S, H = hidden_states.shape
    I = w1_t.shape[1]
    M = B * S

    x2d = hidden_states.reshape(M, H)
    b1_2d = b1.reshape(1, I)
    b2_2d = b2.reshape(1, H)

    # Token tile: as large as practical; ragged final block is handled by Pallas.
    tm = min(tm, M)

    # Intermediate (reduction) tile: keep the per-step weight slices + acc well
    # inside the scoped-VMEM budget with double-buffering headroom.
    w_bytes = jnp.dtype(w1_t.dtype).itemsize
    ti_limit = 1024
    # 2 weight slices * 2 buffers * (H * ti) * itemsize  +  acc (tm*H*4) <= ~24 MiB
    budget = 24 * 1024 * 1024 - tm * H * 4
    while ti_limit > 128 and 4 * H * ti_limit * w_bytes > budget:
        ti_limit -= 128
    ti = _largest_tile(I, base=128, limit=max(ti_limit, 128))

    grid = (pl.cdiv(M, tm), I // ti)

    flops = 2 * M * H * I * 2                      # two matmuls
    bytes_accessed = (
        x2d.size * x2d.dtype.itemsize
        + w1_t.size * w1_t.dtype.itemsize
        + w2_t.size * w2_t.dtype.itemsize
        + b1.size * b1.dtype.itemsize
        + b2.size * b2.dtype.itemsize
        + M * H * hidden_states.dtype.itemsize
    )

    out2d = pl.pallas_call(
        clip_mlp_kernel,
        out_shape=jax.ShapeDtypeStruct((M, H), hidden_states.dtype),
        grid_spec=pltpu.PrefetchScalarGridSpec(
            num_scalar_prefetch=0,
            grid=grid,
            in_specs=[
                pl.BlockSpec((tm, H), lambda i, k: (i, 0)),   # x tile (const over k)
                pl.BlockSpec((H, ti), lambda i, k: (0, k)),   # w1 slice
                pl.BlockSpec((1, ti), lambda i, k: (0, k)),   # b1 slice
                pl.BlockSpec((ti, H), lambda i, k: (k, 0)),   # w2 slice
                pl.BlockSpec((1, H), lambda i, k: (0, 0)),    # b2 (resident)
            ],
            out_specs=pl.BlockSpec((tm, H), lambda i, k: (i, 0)),
            scratch_shapes=[pltpu.VMEM((tm, H), jnp.float32)],
        ),
        compiler_params=pltpu.CompilerParams(
            dimension_semantics=("parallel", "arbitrary"),
            vmem_limit_bytes=64 * 1024 * 1024),
        cost_estimate=pl.CostEstimate(
            flops=flops, transcendentals=M * I, bytes_accessed=bytes_accessed),
    )(x2d, w1_t, b1_2d, w2_t, b2_2d)

    return out2d.reshape(B, S, H)


def reference_mlp(hidden_states, w1, b1, w2, b2):
    # PyTorch layout: w1 (I, H), w2 (H, I)
    h = jnp.einsum("bsh,ih->bsi", hidden_states, w1) + b1
    h = h * jax.nn.sigmoid(1.702 * h)
    return jnp.einsum("bsi,hi->bsh", h, w2) + b2


if __name__ == "__main__":
    # Small config: hidden_size=32, intermediate_size=128, batch=2, seq=8
    B, S, H, I = 2, 8, 32, 128

    key = jax.random.PRNGKey(0)
    kx, kw1, kb1, kw2, kb2 = jax.random.split(key, 5)

    x = jax.random.normal(kx, (B, S, H), dtype=jnp.float32)
    # PyTorch nn.Linear stores weight as (out_features, in_features)
    w1 = jax.random.normal(kw1, (I, H), dtype=jnp.float32) * 0.02
    b1 = jax.random.normal(kb1, (I,), dtype=jnp.float32) * 0.02
    w2 = jax.random.normal(kw2, (H, I), dtype=jnp.float32) * 0.02
    b2 = jax.random.normal(kb2, (H,), dtype=jnp.float32) * 0.02

    # Pre-transpose the static weights once (outside the per-call hot path).
    w1_t = jnp.asarray(w1.T)   # (H, I)
    w2_t = jnp.asarray(w2.T)   # (I, H)

    out = clip_mlp(x, w1_t, b1, w2_t, b2)
    jax.block_until_ready(out)

    ref = reference_mlp(x, w1, b1, w2, b2)
    assert out.shape == (B, S, H)
    assert jnp.allclose(out, ref, atol=1e-5, rtol=1e-5), "mismatch vs reference"

    print("KERNEL_OK")
</pallas_src>

<mosaic_0001>
module attributes {stable_mosaic.version = 11 : i64} {
  func.func @clip_mlp_kernel(%arg0: i32, %arg1: i32, %arg2: memref<16x32xf32, #tpu.memory_space<vmem>>, %arg3: memref<32x128xf32, #tpu.memory_space<vmem>>, %arg4: memref<1x128xf32, #tpu.memory_space<vmem>>, %arg5: memref<128x32xf32, #tpu.memory_space<vmem>>, %arg6: memref<1x32xf32, #tpu.memory_space<vmem>>, %arg7: memref<16x32xf32, #tpu.memory_space<vmem>>, %arg8: memref<16x32xf32, #tpu.memory_space<vmem>>) attributes {dimension_semantics = [#tpu.dimension_semantics<parallel>, #tpu.dimension_semantics<arbitrary>], iteration_bounds = array<i64: 1, 1>, scalar_prefetch = 0 : i64, scratch_operands = 1 : i64, tpu.core_type = #tpu.core_type<tc>, window_params = [{transform_indices = @transform_0, window_bounds = array<i64: 16, 32>}, {transform_indices = @transform_1, window_bounds = array<i64: 32, 128>}, {transform_indices = @transform_2, window_bounds = array<i64: 1, 128>}, {transform_indices = @transform_3, window_bounds = array<i64: 128, 32>}, {pipeline_mode = #tpu.pipeline_mode<synchronous>, transform_indices = @transform_4, window_bounds = array<i64: 1, 32>}, {transform_indices = @transform_5, window_bounds = array<i64: 16, 32>}]} {
    %c0_i32 = arith.constant 0 : i32
    %0 = arith.cmpi eq, %arg1, %c0_i32 : i32
    %1 = arith.extui %0 : i1 to i32
    %c0_i32_0 = arith.constant 0 : i32
    %2 = arith.cmpi ne, %1, %c0_i32_0 : i32
    scf.if %2 {
      %cst_17 = arith.constant 0.000000e+00 : f32
      %25 = vector.broadcast %cst_17 : f32 to vector<16x32xf32>
      %c0_18 = arith.constant 0 : index
      %c0_19 = arith.constant 0 : index
      %26 = vector.load %arg8[%c0_18, %c0_19] : memref<16x32xf32, #tpu.memory_space<vmem>>, vector<16x32xf32>
      tpu.vector_store %arg8[%c0_18, %c0_19], %25 {strides = array<i32>} : memref<16x32xf32, #tpu.memory_space<vmem>>, vector<16x32xf32>,
    } else {
    }
    %c0 = arith.constant 0 : index
    %c0_1 = arith.constant 0 : index
    %3 = vector.load %arg2[%c0, %c0_1] : memref<16x32xf32, #tpu.memory_space<vmem>>, vector<16x32xf32>
    %c0_2 = arith.constant 0 : index
    %c0_3 = arith.constant 0 : index
    %4 = vector.load %arg3[%c0_2, %c0_3] : memref<32x128xf32, #tpu.memory_space<vmem>>, vector<32x128xf32>
    %cst = arith.constant dense<0.000000e+00> : vector<16x128xf32>
    %5 = tpu.matmul %3, %4, %cst {dimension_numbers = #tpu.dot_dimension_numbers<[1], [0], [0], [1], [0, 0, 1, 1], [], []>} : vector<16x32xf32>, vector<32x128xf32>, vector<16x128xf32> -> vector<16x128xf32>
    %c0_4 = arith.constant 0 : index
    %c0_5 = arith.constant 0 : index
    %6 = vector.load %arg4[%c0_4, %c0_5] : memref<1x128xf32, #tpu.memory_space<vmem>>, vector<1x128xf32>
    %7 = vector.broadcast %6 : vector<1x128xf32> to vector<16x128xf32>
    %8 = arith.addf %5, %7 : vector<16x128xf32>
    %cst_6 = arith.constant 1.702000e+00 : f32
    %9 = vector.broadcast %cst_6 : f32 to vector<16x128xf32>
    %10 = arith.mulf %9, %8 : vector<16x128xf32>
    %11 = arith.negf %10 : vector<16x128xf32>
    %12 = math.exp %11 : vector<16x128xf32>
    %cst_7 = arith.constant 1.000000e+00 : f32
    %13 = vector.broadcast %cst_7 : f32 to vector<16x128xf32>
    %14 = arith.addf %13, %12 : vector<16x128xf32>
    %15 = arith.divf %13, %14 : vector<16x128xf32>
    %16 = arith.mulf %8, %15 : vector<16x128xf32>
    %c0_8 = arith.constant 0 : index
    %c0_9 = arith.constant 0 : index
    %17 = vector.load %arg8[%c0_8, %c0_9] : memref<16x32xf32, #tpu.memory_space<vmem>>, vector<16x32xf32>
    %c0_10 = arith.constant 0 : index
    %c0_11 = arith.constant 0 : index
    %18 = vector.load %arg5[%c0_10, %c0_11] : memref<128x32xf32, #tpu.memory_space<vmem>>, vector<128x32xf32>
    %cst_12 = arith.constant dense<0.000000e+00> : vector<16x32xf32>
    %19 = tpu.matmul %16, %18, %cst_12 {dimension_numbers = #tpu.dot_dimension_numbers<[1], [0], [0], [1], [0, 0, 1, 1], [], []>} : vector<16x128xf32>, vector<128x32xf32>, vector<16x32xf32> -> vector<16x32xf32>
    %20 = arith.addf %17, %19 : vector<16x32xf32>
    %c0_13 = arith.constant 0 : index
    %c0_14 = arith.constant 0 : index
    %21 = vector.load %arg8[%c0_13, %c0_14] : memref<16x32xf32, #tpu.memory_space<vmem>>, vector<16x32xf32>
    tpu.vector_store %arg8[%c0_13, %c0_14], %20 {strides = array<i32>} : memref<16x32xf32, #tpu.memory_space<vmem>>, vector<16x32xf32>,
    %c0_i32_15 = arith.constant 0 : i32
    %22 = arith.cmpi eq, %arg1, %c0_i32_15 : i32
    %23 = arith.extui %22 : i1 to i32
    %c0_i32_16 = arith.constant 0 : i32
    %24 = arith.cmpi ne, %23, %c0_i32_16 : i32
    scf.if %24 {
      %c0_17 = arith.constant 0 : index
      %c0_18 = arith.constant 0 : index
      %25 = vector.load %arg8[%c0_17, %c0_18] : memref<16x32xf32, #tpu.memory_space<vmem>>, vector<16x32xf32>
      %c0_19 = arith.constant 0 : index
      %c0_20 = arith.constant 0 : index
      %26 = vector.load %arg6[%c0_19, %c0_20] : memref<1x32xf32, #tpu.memory_space<vmem>>, vector<1x32xf32>
      %27 = vector.broadcast %26 : vector<1x32xf32> to vector<16x32xf32>
      %28 = arith.addf %25, %27 : vector<16x32xf32>
      %c0_21 = arith.constant 0 : index
      %c0_22 = arith.constant 0 : index
      %29 = vector.load %arg7[%c0_21, %c0_22] : memref<16x32xf32, #tpu.memory_space<vmem>>, vector<16x32xf32>
      tpu.vector_store %arg7[%c0_21, %c0_22], %28 {strides = array<i32>} : memref<16x32xf32, #tpu.memory_space<vmem>>, vector<16x32xf32>,
    } else {
    }
    return
  }
  func.func @transform_0(%arg0: i32, %arg1: i32) -> (i32, i32) {
    %c0_i32 = arith.constant 0 : i32
    %c0_i32_0 = arith.constant 0 : i32
    return %arg0, %c0_i32 : i32, i32
  }
  func.func @transform_1(%arg0: i32, %arg1: i32) -> (i32, i32) {
    %c0_i32 = arith.constant 0 : i32
    %c0_i32_0 = arith.constant 0 : i32
    return %c0_i32, %arg1 : i32, i32
  }
  func.func @transform_2(%arg0: i32, %arg1: i32) -> (i32, i32) {
    %c0_i32 = arith.constant 0 : i32
    %c0_i32_0 = arith.constant 0 : i32
    return %c0_i32, %arg1 : i32, i32
  }
  func.func @transform_3(%arg0: i32, %arg1: i32) -> (i32, i32) {
    %c0_i32 = arith.constant 0 : i32
    %c0_i32_0 = arith.constant 0 : i32
    return %arg1, %c0_i32 : i32, i32
  }
  func.func @transform_4(%arg0: i32, %arg1: i32) -> (i32, i32) {
    %c0_i32 = arith.constant 0 : i32
    %c0_i32_0 = arith.constant 0 : i32
    %c0_i32_1 = arith.constant 0 : i32
    return %c0_i32, %c0_i32_0 : i32, i32
  }
  func.func @transform_5(%arg0: i32, %arg1: i32) -> (i32, i32) {
    %c0_i32 = arith.constant 0 : i32
    %c0_i32_0 = arith.constant 0 : i32
    return %arg0, %c0_i32 : i32, i32
  }
}

</mosaic_0001>

<llo_original>
// kernel: tpu_custom_call.1
$region0: #{tpu_custom_call.1}
  #allocation0 [shape = 'u32[]', space=smem, size = 0x4, offset = 0x4, fixed_abs, tag = 'smem constant byte address 0x4 - core index']
  #allocation1 [shape = 'u32[144,128]{1,0:T(1,128)}', space=vmem, size = 0x12000, scoped, tag = 'internal scratch']
  #allocation2 [shape = 'f32[16,32]{1,0:T(8,128)}', space=vmem, size = 0x2000, scoped, tag = 'scratch operand']
  %s0 = inlined_call_operand.hbm [shape: f32[16,32], index: 0, kind: input, shape index: {}]
  %s1 = inlined_call_operand.hbm [shape: f32[32,128], index: 1, kind: input, shape index: {}]
  %s2 = inlined_call_operand.hbm [shape: f32[1,128], index: 2, kind: input, shape index: {}]
  %s3 = inlined_call_operand.hbm [shape: f32[128,32], index: 3, kind: input, shape index: {}]
  %s4 = inlined_call_operand.hbm [shape: f32[1,32], index: 4, kind: input, shape index: {}]
  %s5 = inlined_call_operand.hbm [shape: f32[16,32], index: 5, kind: output, shape index: {}]
  %s6 = sld [smem:[#allocation0]]
  $region58: #{tpu_custom_call.1} parent=0
    _
  %s8 = ssub.s32 1, %s6
  %s9 = scalar_select 0, %s8, %s6
  $region1: #{tpu_custom_call.1} parent=0
    #allocation3 [shape = 'u8[8192]{0}', space=vmem, size = 0x2000, scoped, tag = 'input window, operand 0, single buffered']
    #allocation4 [shape = 's32[1]{0}', space=sflag, size = 0x4, scoped, tag = 'scoped memory for tpu_custom_call.1']
    #allocation5 [shape = 's32[1]{0}', space=sflag, size = 0x4, scoped, tag = 'scoped memory for tpu_custom_call.1']
    #allocation6 [shape = 'u8[16384]{0}', space=vmem, size = 0x4000, scoped, tag = 'input window, operand 1, single buffered']
    #allocation7 [shape = 's32[1]{0}', space=sflag, size = 0x4, scoped, tag = 'scoped memory for tpu_custom_call.1']
    #allocation8 [shape = 'u8[512]{0}', space=vmem, size = 0x400, scoped, tag = 'input window, operand 2, single buffered']
    #allocation9 [shape = 'u8[65536]{0}', space=vmem, size = 0x10000, scoped, tag = 'input window, operand 3, single buffered']
    #allocation10 [shape = 's32[1]{0}', space=sflag, size = 0x4, scoped, tag = 'scoped memory for tpu_custom_call.1']
    #allocation11 [shape = 'u8[512]{0}', space=vmem, size = 0x400, scoped, tag = 'input window, operand 4, single buffered']
    #allocation12 [shape = 'u8[8192]{0}', space=vmem, size = 0x2000, scoped, tag = 'output window, operand 0, single buffered']
    %10 = vsyncpa [#allocation4], 0
    %11 = vsyncpa [#allocation7], 0
    %12 = vsyncpa [#allocation10], 0
    %13 = vsyncpa [#allocation5], 0
    // Predicated region
    $region2: #{tpu_custom_call.1} parent=1 // pred_check
      _
    $region3: #{tpu_custom_call.1} parent=1 // pred_check_branch
      %15 = sbr.rel (0) target = $region5
    $region4: #{tpu_custom_call.1} parent=1 // pred_region
      %s17 = ssub.s32 256, 256
      %18 = vsyncadd [#allocation4], %s17
      %s19 = sshll.u32 [#allocation3], 4
      %s20 = int_to_ptr.vmem [resolvable:$true] %s19
      %25 = dma.hbm_to_vmem [thread:$0]  %s0, 256, %s20, [#allocation4], 128, 128, 8
    $region5: #{tpu_custom_call.1} parent=1 // pred_fallthru
      _
    // Predicated region
    $region6: #{tpu_custom_call.1} parent=1 // pred_check
      _
    $region7: #{tpu_custom_call.1} parent=1 // pred_check_branch
      %27 = sbr.rel (0) target = $region9
    $region8: #{tpu_custom_call.1} parent=1 // pred_region
      %s29 = ssub.s32 512, 512
      %30 = vsyncadd [#allocation7], %s29
      %s31 = sshll.u32 [#allocation6], 4
      %s32 = int_to_ptr.vmem [resolvable:$true] %s31
      %37 = dma.hbm_to_vmem [thread:$0]  %s1, 512, %s32, [#allocation7], 128, 128, 8
    $region9: #{tpu_custom_call.1} parent=1 // pred_fallthru
      _
    // Predicated region
    $region10: #{tpu_custom_call.1} parent=1 // pred_check
      _
    $region11: #{tpu_custom_call.1} parent=1 // pred_check_branch
      %39 = sbr.rel (0) target = $region13
    $region12: #{tpu_custom_call.1} parent=1 // pred_region
      %s41 = ssub.s32 16, 16
      %42 = vsyncadd [#allocation7], %s41
      %s44 = sshll.u32 [#allocation8], 4
      %s45 = int_to_ptr.vmem [resolvable:$true] %s44
      %47 = dma.hbm_to_vmem [thread:$0]  %s2, 16, %s45, [#allocation7]
    $region13: #{tpu_custom_call.1} parent=1 // pred_fallthru
      _
    // Predicated region
    $region14: #{tpu_custom_call.1} parent=1 // pred_check
      _
    $region15: #{tpu_custom_call.1} parent=1 // pred_check_branch
      %49 = sbr.rel (0) target = $region17
    $region16: #{tpu_custom_call.1} parent=1 // pred_region
      %s51 = ssub.s32 2048, 2048
      %52 = vsyncadd [#allocation10], %s51
      %s53 = sshll.u32 [#allocation9], 4
      %s54 = int_to_ptr.vmem [resolvable:$true] %s53
      %59 = dma.hbm_to_vmem [thread:$0]  %s3, 2048, %s54, [#allocation10], 128, 128, 8
    $region17: #{tpu_custom_call.1} parent=1 // pred_fallthru
      _
    // Predicated region
    $region18: #{tpu_custom_call.1} parent=1 // pred_check
      _
    $region19: #{tpu_custom_call.1} parent=1 // pred_check_branch
      %61 = sbr.rel (0) target = $region21
    $region20: #{tpu_custom_call.1} parent=1 // pred_region
      %s63 = ssub.s32 16, 16
      %64 = vsyncadd [#allocation10], %s63
      %s66 = sshll.u32 [#allocation11], 4
      %s67 = int_to_ptr.vmem [resolvable:$true] %s66
      %69 = dma.hbm_to_vmem [thread:$0]  %s4, 16, %s67, [#allocation10]
    $region21: #{tpu_custom_call.1} parent=1 // pred_fallthru
      _
    // Predicated region
    $region22: #{tpu_custom_call.1} parent=1 // pred_check
      _
    $region23: #{tpu_custom_call.1} parent=1 // pred_check_branch
      %71 = sbr.rel (0) target = $region25
    $region24: #{tpu_custom_call.1} parent=1 // pred_region
      %72 = dma.done [#allocation4], 256
    $region25: #{tpu_custom_call.1} parent=1 // pred_fallthru
      _
    // Predicated region
    $region26: #{tpu_custom_call.1} parent=1 // pred_check
      _
    $region27: #{tpu_custom_call.1} parent=1 // pred_check_branch
      %74 = sbr.rel (0) target = $region29
    $region28: #{tpu_custom_call.1} parent=1 // pred_region
      %75 = dma.done [#allocation7], 512
    $region29: #{tpu_custom_call.1} parent=1 // pred_fallthru
      _
    // Predicated region
    $region30: #{tpu_custom_call.1} parent=1 // pred_check
      _
    $region31: #{tpu_custom_call.1} parent=1 // pred_check_branch
      %77 = sbr.rel (0) target = $region33
    $region32: #{tpu_custom_call.1} parent=1 // pred_region
      %78 = dma.done [#allocation7], 16
    $region33: #{tpu_custom_call.1} parent=1 // pred_fallthru
      _
    // Predicated region
    $region34: #{tpu_custom_call.1} parent=1 // pred_check
      _
    $region35: #{tpu_custom_call.1} parent=1 // pred_check_branch
      %80 = sbr.rel (0) target = $region37
    $region36: #{tpu_custom_call.1} parent=1 // pred_region
      %81 = dma.done [#allocation10], 2048
    $region37: #{tpu_custom_call.1} parent=1 // pred_fallthru
      _
    // Predicated region
    $region38: #{tpu_custom_call.1} parent=1 // pred_check
      _
    $region39: #{tpu_custom_call.1} parent=1 // pred_check_branch
      %83 = sbr.rel (0) target = $region41
    $region40: #{tpu_custom_call.1} parent=1 // pred_region
      %84 = dma.done [#allocation10], 16
    $region41: #{tpu_custom_call.1} parent=1 // pred_fallthru
      _
    %p85 = scmp.eq.s32.totalorder 0, 0
    // Predicated region
    $region42: #{tpu_custom_call.1} parent=1 // pred_check
      %p86 = pneg %p85
    $region43: #{tpu_custom_call.1} parent=1 // pred_check_branch
      %88 = sbr.rel (%p86) target = $region45
    $region44: #{tpu_custom_call.1} parent=1 // pred_region
      %vm89 = vcmask 261120
      %90 = vst.msk [vmem:[#allocation2] sm:$0xff] %vm89, 0.0
      %91 = vst.msk [vmem:[#allocation2 + $0x8] sm:$0xff] %vm89, 0.0
    $region45: #{tpu_custom_call.1} parent=1 // pred_fallthru
      _
    %v92 = vld [vmem:[#allocation3] sm:$0xff]
    %v93 = vld [vmem:[#allocation3 + $0x8] sm:$0xff]
    %v94 = vld [vmem:[#allocation6] sm:$0xff]
    %v95 = vld [vmem:[#allocation6 + $0x8] sm:$0xff]
    %v96 = vld [vmem:[#allocation6 + $0x10] sm:$0xff]
    %v97 = vld [vmem:[#allocation6 + $0x18] sm:$0xff]
    %v98 = vld [vmem:[#allocation8] sm:$0x1]
    %v100 = vlaneseq
    %v101 = vshrl.u32 %v100, 7
    %v102 = vsub.s32 0, %v101
    %v103 = vrot.slane %v98, %v102
    %vm105 = vcmask 261120
    %v107 = vsel %vm105, %v92, 0
    %v110 = vsel %vm105, %v93, 0
    %112 = vmatprep.subr.mxu0 0.0
    %113 = vmatpush1.msra.mxu0 %v94
    %114 = vmatprep.subr.mxu0 0.0
    %115 = vmatpush1.msra.mxu0 %v95
    %116 = vmatprep.subr.mxu0 0.0
    %117 = vmatpush1.msra.mxu0 %v96
    %118 = vmatprep.subr.mxu0 0.0
    %119 = vmatpush1.msra.mxu0 %v97
    %120 = vmatprep.subr.mxu0 0.0
    %121 = vmatpush1.msra.mxu0 0.0
    %122 = vmatprep.subr.mxu0 0.0
    %123 = vmatpush1.msra.mxu0 0.0
    %124 = vmatprep.subr.mxu0 0.0
    %125 = vmatpush1.msra.mxu0 0.0
    %126 = vmatprep.subr.mxu0 0.0
    %127 = vmatpush1.msra.mxu0 0.0
    %128 = vmatprep.subr.mxu0 0.0
    %129 = vmatpush1.msra.mxu0 0.0
    %130 = vmatprep.subr.mxu0 0.0
    %131 = vmatpush1.msra.mxu0 0.0
    %132 = vmatprep.subr.mxu0 0.0
    %133 = vmatpush1.msra.mxu0 0.0
    %134 = vmatprep.subr.mxu0 0.0
    %135 = vmatpush1.msra.mxu0 0.0
    %136 = vmatprep.subr.mxu0 0.0
    %137 = vmatpush1.msra.mxu0 0.0
    %138 = vmatprep.subr.mxu0 0.0
    %139 = vmatpush1.msra.mxu0 0.0
    %140 = vmatprep.subr.mxu0 0.0
    %141 = vmatpush1.msra.mxu0 0.0
    %142 = vmatprep.subr.mxu0 0.0
    %143 = vmatpush1.msra.mxu0 0.0
    %144 = vmatprep.subr.mxu0 0.0
    %145 = vmatpush1.msra.mxu0 0.0
    %146 = vmatprep.subr.mxu0 0.0
    %147 = vmatpush1.msra.mxu0 0.0
    %148 = vmatprep.subr.mxu0 0.0
    %149 = vmatpush1.msra.mxu0 0.0
    %150 = vmatprep.subr.mxu0 0.0
    %151 = vmatpush1.msra.mxu0 0.0
    %152 = vmatprep.subr.mxu0 0.0
    %153 = vmatpush1.msra.mxu0 0.0
    %154 = vmatprep.subr.mxu0 0.0
    %155 = vmatpush1.msra.mxu0 0.0
    %156 = vmatprep.subr.mxu0 0.0
    %157 = vmatpush1.msra.mxu0 0.0
    %158 = vmatprep.subr.mxu0 0.0
    %159 = vmatpush1.msra.mxu0 0.0
    %160 = vmatprep.subr.mxu0 0.0
    %161 = vmatpush1.msra.mxu0 0.0
    %162 = vmatprep.subr.mxu0 0.0
    %163 = vmatpush1.msra.mxu0 0.0
    %164 = vmatprep.subr.mxu0 0.0
    %165 = vmatpush1.msra.mxu0 0.0
    %166 = vmatprep.subr.mxu0 0.0
    %167 = vmatpush1.msra.mxu0 0.0
    %168 = vmatprep.subr.mxu0 0.0
    %169 = vmatpush1.msra.mxu0 0.0
    %170 = vmatprep.subr.mxu0 0.0
    %171 = vmatpush1.msra.mxu0 0.0
    %172 = vmatprep.subr.mxu0 0.0
    %173 = vmatpush1.msra.mxu0 0.0
    %174 = vmatprep.subr.mxu0 0.0
    %175 = vmatpush1.msra.mxu0 0.0
    %176 = vmatprep.mubr.f32.mxu0 0.0
    %177 = vmatmul.mubr.f32.gmra.mrb[0].mxu0 %v107
    %v178 = vpop.f32.mrb[0].mxu0
    %v179 = vadd.f32 %v103, %v178
    %v180 = vpop.f32.mrb[0].mxu0
    %181 = vmatprep.mubr.f32.mxu0 0.0
    %182 = vmatmul.mubr.f32.gmra.mrb[0].mxu0 %v110
    %v183 = vpop.f32.mrb[0].mxu0
    %v184 = vadd.f32 %v103, %v183
    %v185 = vpop.f32.mrb[0].mxu0
    %186 = vdwg.mxu0
    %v187 = vmul.f32 %v179, 1.702
    %v188 = vmul.f32 %v184, 1.702
    %v189 = vxor.u32 %v187, 2147483648
    %v190 = vxor.u32 %v188, 2147483648
    %v191 = vmul.f32 %v189, 1.442695
    %v192 = vpow.pop %v191
    %v193 = vmul.f32 %v190, 1.442695
    %v194 = vpow.pop %v193
    %v195 = vadd.f32 %v192, 1.0
    %v196 = vadd.f32 %v194, 1.0
    %v197 = vrcp.pop %v195
    %v198 = vmul.f32 1.0, %v197
    %v199 = vrcp.pop %v196
    %v200 = vmul.f32 1.0, %v199
    %v201 = vmul.f32 %v179, %v198
    %v202 = vmul.f32 %v184, %v200
    %v203 = vld [vmem:[#allocation2] sm:$0xff]
    %v204 = vld [vmem:[#allocation2 + $0x8] sm:$0xff]
    %v205 = vld [vmem:[#allocation9] sm:$0xff]
    %v206 = vld [vmem:[#allocation9 + $0x8] sm:$0xff]
    %v207 = vld [vmem:[#allocation9 + $0x10] sm:$0xff]
    %v208 = vld [vmem:[#allocation9 + $0x18] sm:$0xff]
    %v209 = vld [vmem:[#allocation9 + $0x20] sm:$0xff]
    %v210 = vld [vmem:[#allocation9 + $0x28] sm:$0xff]
    %v211 = vld [vmem:[#allocation9 + $0x30] sm:$0xff]
    %v212 = vld [vmem:[#allocation9 + $0x38] sm:$0xff]
    %v213 = vld [vmem:[#allocation9 + $0x40] sm:$0xff]
    %v214 = vld [vmem:[#allocation9 + $0x48] sm:$0xff]
    %v215 = vld [vmem:[#allocation9 + $0x50] sm:$0xff]
    %v216 = vld [vmem:[#allocation9 + $0x58] sm:$0xff]
    %v217 = vld [vmem:[#allocation9 + $0x60] sm:$0xff]
    %v218 = vld [vmem:[#allocation9 + $0x68] sm:$0xff]
    %v219 = vld [vmem:[#allocation9 + $0x70] sm:$0xff]
    %v220 = vld [vmem:[#allocation9 + $0x78] sm:$0xff]
    %221 = vmatprep.subr.mxu0 0.0
    %222 = vmatpush1.msra.mxu0 %v205
    %223 = vmatprep.subr.mxu0 0.0
    %224 = vmatpush1.msra.mxu0 %v206
    %225 = vmatprep.subr.mxu0 0.0
    %226 = vmatpush1.msra.mxu0 %v207
    %227 = vmatprep.subr.mxu0 0.0
    %228 = vmatpush1.msra.mxu0 %v208
    %229 = vmatprep.subr.mxu0 0.0
    %230 = vmatpush1.msra.mxu0 %v209
    %231 = vmatprep.subr.mxu0 0.0
    %232 = vmatpush1.msra.mxu0 %v210
    %233 = vmatprep.subr.mxu0 0.0
    %234 = vmatpush1.msra.mxu0 %v211
    %235 = vmatprep.subr.mxu0 0.0
    %236 = vmatpush1.msra.mxu0 %v212
    %237 = vmatprep.subr.mxu0 0.0
    %238 = vmatpush1.msra.mxu0 %v213
    %239 = vmatprep.subr.mxu0 0.0
    %240 = vmatpush1.msra.mxu0 %v214
    %241 = vmatprep.subr.mxu0 0.0
    %242 = vmatpush1.msra.mxu0 %v215
    %243 = vmatprep.subr.mxu0 0.0
    %244 = vmatpush1.msra.mxu0 %v216
    %245 = vmatprep.subr.mxu0 0.0
    %246 = vmatpush1.msra.mxu0 %v217
    %247 = vmatprep.subr.mxu0 0.0
    %248 = vmatpush1.msra.mxu0 %v218
    %249 = vmatprep.subr.mxu0 0.0
    %250 = vmatpush1.msra.mxu0 %v219
    %251 = vmatprep.subr.mxu0 0.0
    %252 = vmatpush1.msra.mxu0 %v220
    %253 = vmatprep.subr.mxu0 0.0
    %254 = vmatpush1.msra.mxu0 0.0
    %255 = vmatprep.subr.mxu0 0.0
    %256 = vmatpush1.msra.mxu0 0.0
    %257 = vmatprep.subr.mxu0 0.0
    %258 = vmatpush1.msra.mxu0 0.0
    %259 = vmatprep.subr.mxu0 0.0
    %260 = vmatpush1.msra.mxu0 0.0
    %261 = vmatprep.subr.mxu0 0.0
    %262 = vmatpush1.msra.mxu0 0.0
    %263 = vmatprep.subr.mxu0 0.0
    %264 = vmatpush1.msra.mxu0 0.0
    %265 = vmatprep.subr.mxu0 0.0
    %266 = vmatpush1.msra.mxu0 0.0
    %267 = vmatprep.subr.mxu0 0.0
    %268 = vmatpush1.msra.mxu0 0.0
    %269 = vmatprep.subr.mxu0 0.0
    %270 = vmatpush1.msra.mxu0 0.0
    %271 = vmatprep.subr.mxu0 0.0
    %272 = vmatpush1.msra.mxu0 0.0
    %273 = vmatprep.subr.mxu0 0.0
    %274 = vmatpush1.msra.mxu0 0.0
    %275 = vmatprep.subr.mxu0 0.0
    %276 = vmatpush1.msra.mxu0 0.0
    %277 = vmatprep.subr.mxu0 0.0
    %278 = vmatpush1.msra.mxu0 0.0
    %279 = vmatprep.subr.mxu0 0.0
    %280 = vmatpush1.msra.mxu0 0.0
    %281 = vmatprep.subr.mxu0 0.0
    %282 = vmatpush1.msra.mxu0 0.0
    %283 = vmatprep.subr.mxu0 0.0
    %284 = vmatpush1.msra.mxu0 0.0
    %285 = vmatprep.mubr.f32.mxu0 0.0
    %286 = vmatmul.mubr.f32.gmra.mrb[0].mxu0 %v201
    %v287 = vpop.f32.mrb[0].mxu0
    %v288 = vadd.f32 0.0, %v287
    %v289 = vpop.f32.mrb[0].mxu0
    %290 = vmatprep.mubr.f32.mxu0 0.0
    %291 = vmatmul.mubr.f32.gmra.mrb[0].mxu0 %v202
    %v292 = vpop.f32.mrb[0].mxu0
    %v293 = vadd.f32 0.0, %v292
    %v294 = vpop.f32.mrb[0].mxu0
    %295 = vdwg.mxu0
    %v296 = vadd.f32 %v203, %v288
    %v297 = vadd.f32 %v204, %v293
    %298 = vst.msk [vmem:[#allocation2] sm:$0xff] %vm105, %v296
    %299 = vst.msk [vmem:[#allocation2 + $0x8] sm:$0xff] %vm105, %v297
    // Predicated region
    $region46: #{tpu_custom_call.1} parent=1 // pred_check
      %p300 = pneg %p85
    $region47: #{tpu_custom_call.1} parent=1 // pred_check_branch
      %302 = sbr.rel (%p300) target = $region49
    $region48: #{tpu_custom_call.1} parent=1 // pred_region
      %v303 = vld [vmem:[#allocation2] sm:$0xff]
      %v304 = vld [vmem:[#allocation2 + $0x8] sm:$0xff]
      %v305 = vld [vmem:[#allocation11] sm:$0x1]
      %v307 = vlaneseq
      %v308 = vshrl.u32 %v307, 7
      %v309 = vsub.s32 0, %v308
      %v310 = vrot.slane %v305, %v309
      %v312 = vadd.f32 %v303, %v310
      %v313 = vadd.f32 %v304, %v310
      %314 = vst.msk [vmem:[#allocation12] sm:$0xff] %vm105, %v312
      %315 = vst.msk [vmem:[#allocation12 + $0x8] sm:$0xff] %vm105, %v313
    $region49: #{tpu_custom_call.1} parent=1 // pred_fallthru
      _
    // Predicated region
    $region50: #{tpu_custom_call.1} parent=1 // pred_check
      _
    $region51: #{tpu_custom_call.1} parent=1 // pred_check_branch
      %317 = sbr.rel (0) target = $region53
    $region52: #{tpu_custom_call.1} parent=1 // pred_region
      %s319 = ssub.s32 256, 256
      %320 = vsyncadd [#allocation5], %s319
      %s321 = sshll.u32 [#allocation12], 4
      %s322 = int_to_ptr.vmem [resolvable:$true] %s321
      %327 = dma.vmem_to_hbm [thread:$0]  %s322, 256, %s5, [#allocation5], 128, 128, 8
    $region53: #{tpu_custom_call.1} parent=1 // pred_fallthru
      _
    // Predicated region
    $region54: #{tpu_custom_call.1} parent=1 // pred_check
      _
    $region55: #{tpu_custom_call.1} parent=1 // pred_check_branch
      %329 = sbr.rel (0) target = $region57
    $region56: #{tpu_custom_call.1} parent=1 // pred_region
      %330 = dma.done [#allocation5], 256
    $region57: #{tpu_custom_call.1} parent=1 // pred_fallthru
      _
    %331 = vsyncpa [#allocation4], 1
    %332 = vsyncpa [#allocation7], 1
    %333 = vsyncpa [#allocation10], 1
    %334 = vsyncpa [#allocation5], 1

</llo_original>
